<compile_context>
chip_gen: v7x
topology: tpu7x:2x2x1
jax: 0.10.0
libtpu: 0.0.40
codegen_flags: <defaults>
</compile_context>

<pallas_src>
import jax
import jax.numpy as jnp
from jax.experimental import pallas as pl
from jax.experimental.pallas import tpu as pltpu

_LANES = 128


def _cdiv(a, b):
    return -(-a // b)


def _round_up(x, m):
    return ((x + m - 1) // m) * m


def _vmem_capacity_bytes():
    """Physical VMEM of the local chip; conservative (v7x) fallback."""
    try:
        cap = getattr(pltpu.get_tpu_info(), "vmem_capacity_bytes", None)
        if cap:
            return int(cap)
    except Exception:
        pass
    return 64 << 20


def _make_bce_kernel(weights, block_rows, total):
    """Kernel: per-block weighted sum of stable BCE-with-logits over n preds."""
    n = len(weights)
    full_rows = total // _LANES      # rows in which all 128 lanes are valid
    rem = total % _LANES             # valid lanes in the (optional) last row

    def kernel(*refs):
        x_refs = refs[:n]
        z_ref = refs[n]
        o_ref = refs[n + 1]

        z = z_ref[...].astype(jnp.float32)          # targets, read ONCE
        shape = z.shape

        # Global (row, col) of every element in this block -> tail mask.
        base_row = pl.program_id(0) * block_rows
        row = jax.lax.broadcasted_iota(jnp.int32, shape, 0) + base_row
        col = jax.lax.broadcasted_iota(jnp.int32, shape, 1)
        valid = row < full_rows
        if rem:
            valid = valid | ((row == full_rows) & (col < rem))

        acc = None
        for x_ref, w in zip(x_refs, weights):
            x = x_ref[...].astype(jnp.float32)      # logits
            # PyTorch stable formula: max(x,0) - x*z + log1p(exp(-|x|)).
            # log1p computed without 1+t rounding loss for tiny t (series).
            t = jnp.exp(-jnp.abs(x))
            softplus = jnp.where(t > 1e-4,
                                 jnp.log(1.0 + t),
                                 t * (1.0 - 0.5 * t))
            per = jnp.maximum(x, 0.0) - x * z + softplus
            if w != 1.0:
                per = per * w
            acc = per if acc is None else acc + per

        acc = jnp.where(valid, acc, 0.0)
        s = jnp.sum(acc)
        # Write the partial sum into a full (8,128)-aligned tile (unmasked
        # store); the wrapper reads element [:, 0, 0].
        o_ref[...] = jnp.broadcast_to(s, o_ref.shape)

    return kernel


def _weighted_bce_mean(pred_list, labels, weights):
    """sum_i weights[i] * mean(BCEWithLogits(pred_list[i], labels)).

    All preds must have the same shape as labels (enforced by caller).
    """
    arrays = list(pred_list) + [labels]
    weights = [float(w) for w in weights]
    total = int(labels.size)

    # ---- Lane-dense 2-D views (no full-array padding copy in common case).
    pad = (-total) % _LANES
    flats = [a.reshape(-1) for a in arrays]
    if pad:
        # TODO(synk): only hit when numel % 128 != 0; this tiny pad still costs
        # one XLA copy per input. Values are irrelevant (masked in-kernel).
        flats = [jnp.pad(f, (0, pad)) for f in flats]
    rows = (total + pad) // _LANES
    views = [f.reshape(rows, _LANES) for f in flats]

    # ---- Generation-aware block sizing.
    itembytes = sum(a.dtype.itemsize for a in arrays)
    sublane = max(max(8, 32 // a.dtype.itemsize) for a in arrays)  # 8/16/32
    budget = min(16 << 20, _vmem_capacity_bytes() // 4)   # dbl-buffered inputs
    per_row_bytes = 2 * _LANES * itembytes                 # x2 pipeline buffers
    max_block_rows = max(sublane, (budget // per_row_bytes) // sublane * sublane)

    # ---- Grid: >=2 (preferably even) blocks so both v7x TCs get work.
    target_blocks = max(1, _cdiv(rows, max_block_rows))
    if rows > sublane:
        target_blocks = max(2, target_blocks)
        if target_blocks % 2:
            target_blocks += 1
    block_rows = min(max_block_rows,
                     _round_up(_cdiv(rows, target_blocks), sublane))
    num_blocks = _cdiv(rows, block_rows)   # every block has >=1 valid row

    kernel = _make_bce_kernel(weights, block_rows, total)
    n_preds = len(pred_list)

    partials = pl.pallas_call(
        kernel,
        out_shape=jax.ShapeDtypeStruct((num_blocks, 8, _LANES), jnp.float32),
        grid=(num_blocks,),
        in_specs=[pl.BlockSpec((block_rows, _LANES), lambda i: (i, 0))
                  for _ in arrays],
        out_specs=pl.BlockSpec((1, 8, _LANES), lambda i: (i, 0, 0)),
        compiler_params=pltpu.CompilerParams(
            dimension_semantics=("parallel",),
            vmem_limit_bytes=int(per_row_bytes * block_rows + (8 << 20)),
        ),
        cost_estimate=pl.CostEstimate(
            flops=8 * total * n_preds,
            transcendentals=2 * total * n_preds,
            bytes_accessed=sum(int(a.size) * a.dtype.itemsize for a in arrays)
                           + num_blocks * 8 * _LANES * 4,
        ),
    )(*views)

    return jnp.sum(partials[:, 0, 0]) / float(total)


def _normalize(pred, labels):
    """PyTorch _forward squeeze handling (squeeze(1) no-ops if size != 1)."""
    if pred.ndim == 4 and labels.ndim == 3 and pred.shape[1] == 1:
        pred = jnp.squeeze(pred, axis=1)
    elif pred.ndim == 3 and labels.ndim == 4 and labels.shape[1] == 1:
        labels = jnp.squeeze(labels, axis=1)
    assert pred.shape == labels.shape, (pred.shape, labels.shape)
    return pred, labels


def bce_loss(preds, labels, aux_weights=(1.0, 0.4, 0.4)):
    """Mirrors BCELoss.forward.

    Note: the PyTorch module stores `weight` but never forwards it to
    BCEWithLogitsLoss, so no per-element weighting is applied here either.
    """
    if isinstance(preds, (tuple, list)):
        pairs = list(zip(preds, aux_weights))
    else:
        pairs = [(preds, 1.0)]

    norm = [(_normalize(p, labels), float(w)) for p, w in pairs]
    pred_shapes = {p.shape for (p, _), _ in norm}

    if len(pred_shapes) == 1:
        # Fused path: one kernel, labels streamed from HBM exactly once.
        pred_list = [p for (p, _), _ in norm]
        lbl = norm[0][0][1]
        weights = [w for _, w in norm]
        return _weighted_bce_mean(pred_list, lbl, weights)

    # Fallback (different-shaped aux heads): one kernel call per prediction.
    out = 0.0
    for (p, l), w in norm:
        out = out + w * _weighted_bce_mean([p], l, [1.0])
    return out


# ---------------------------------------------------------------------------
# Pure-JAX reference mirroring the PyTorch module exactly.
# ---------------------------------------------------------------------------
def _reference_single(preds, labels):
    preds, labels = _normalize(preds, labels)
    x = preds.astype(jnp.float32)
    z = labels.astype(jnp.float32)
    per = jnp.maximum(x, 0.0) - x * z + jnp.log1p(jnp.exp(-jnp.abs(x)))
    return jnp.mean(per)


def _reference_loss(preds, labels, aux_weights=(1.0, 0.4, 0.4)):
    if isinstance(preds, (tuple, list)):
        return sum(w * _reference_single(p, labels)
                   for p, w in zip(preds, aux_weights))
    return _reference_single(preds, labels)


if __name__ == "__main__":
    key = jax.random.PRNGKey(0)
    k_p, k_l, k_a1, k_a2, k_o = jax.random.split(key, 5)
    N, H, W = 2, 16, 16
    preds = jax.random.normal(k_p, (N, 1, H, W), dtype=jnp.float32)      # logits
    labels = (jax.random.uniform(k_l, (N, H, W)) > 0.5).astype(jnp.float32)

    # Single-prediction path (4-D preds vs 3-D labels -> squeeze path).
    loss = jax.block_until_ready(bce_loss(preds, labels))
    ref = jax.block_until_ready(_reference_loss(preds, labels))
    assert jnp.allclose(loss, ref, rtol=1e-5, atol=1e-5), (loss, ref)

    # Tuple-of-predictions path with aux weights [1, 0.4, 0.4] (fused kernel).
    aux1 = jax.random.normal(k_a1, (N, 1, H, W), dtype=jnp.float32)
    aux2 = jax.random.normal(k_a2, (N, 1, H, W), dtype=jnp.float32)
    loss_t = jax.block_until_ready(bce_loss((preds, aux1, aux2), labels))
    ref_t = jax.block_until_ready(_reference_loss((preds, aux1, aux2), labels))
    assert jnp.allclose(loss_t, ref_t, rtol=1e-5, atol=1e-5), (loss_t, ref_t)

    # Odd size (numel not a multiple of 128) exercises the in-kernel tail mask.
    p_odd = jax.random.normal(k_o, (2, 17, 19), dtype=jnp.float32)
    l_odd = (jax.random.uniform(k_l, (2, 17, 19)) > 0.5).astype(jnp.float32)
    loss_o = jax.block_until_ready(bce_loss(p_odd, l_odd))
    ref_o = jax.block_until_ready(_reference_loss(p_odd, l_odd))
    assert jnp.allclose(loss_o, ref_o, rtol=1e-5, atol=1e-5), (loss_o, ref_o)

    print("KERNEL_OK")
</pallas_src>

<mosaic_0001>
module attributes {stable_mosaic.version = 11 : i64} {
  func.func @kernel(%arg0: i32, %arg1: memref<8x128xf32, #tpu.memory_space<vmem>>, %arg2: memref<8x128xf32, #tpu.memory_space<vmem>>, %arg3: memref<1x8x128xf32, #tpu.memory_space<vmem>>) attributes {dimension_semantics = [#tpu.dimension_semantics<parallel>], iteration_bounds = array<i64: 1>, scalar_prefetch = 0 : i64, scratch_operands = 0 : i64, tpu.core_type = #tpu.core_type<tc>, window_params = [{transform_indices = @transform_0, window_bounds = array<i64: 8, 128>}, {transform_indices = @transform_1, window_bounds = array<i64: 8, 128>}, {transform_indices = @transform_2, window_bounds = array<i64: 1, 8, 128>}]} {
    %c0 = arith.constant 0 : index
    %c0_0 = arith.constant 0 : index
    %0 = vector.load %arg2[%c0, %c0_0] : memref<8x128xf32, #tpu.memory_space<vmem>>, vector<8x128xf32>
    %c8_i32 = arith.constant 8 : i32
    %1 = arith.muli %arg0, %c8_i32 : i32
    %2 = tpu.iota {dimensions = array<i32: 0>} : vector<8x128xi32>
    %3 = vector.broadcast %1 : i32 to vector<8x128xi32>
    %4 = arith.addi %2, %3 : vector<8x128xi32>
    %c4_i32 = arith.constant 4 : i32
    %5 = vector.broadcast %c4_i32 : i32 to vector<8x128xi32>
    %6 = arith.cmpi slt, %4, %5 : vector<8x128xi32>
    %c0_1 = arith.constant 0 : index
    %c0_2 = arith.constant 0 : index
    %7 = vector.load %arg1[%c0_1, %c0_2] : memref<8x128xf32, #tpu.memory_space<vmem>>, vector<8x128xf32>
    %8 = math.absf %7 : vector<8x128xf32>
    %cst = arith.constant 0.000000e+00 : f32
    %9 = vector.broadcast %cst : f32 to vector<8x128xf32>
    %10 = arith.subf %9, %8 : vector<8x128xf32>
    %11 = math.exp %10 : vector<8x128xf32>
    %cst_3 = arith.constant 9.99999974E-5 : f32
    %12 = vector.broadcast %cst_3 : f32 to vector<8x128xf32>
    %13 = arith.cmpf ogt, %11, %12 : vector<8x128xf32>
    %cst_4 = arith.constant 1.000000e+00 : f32
    %14 = vector.broadcast %cst_4 : f32 to vector<8x128xf32>
    %15 = arith.addf %14, %11 : vector<8x128xf32>
    %16 = math.log %15 : vector<8x128xf32>
    %cst_5 = arith.constant 5.000000e-01 : f32
    %17 = vector.broadcast %cst_5 : f32 to vector<8x128xf32>
    %18 = arith.mulf %17, %11 : vector<8x128xf32>
    %cst_6 = arith.constant 1.000000e+00 : f32
    %19 = vector.broadcast %cst_6 : f32 to vector<8x128xf32>
    %20 = arith.subf %19, %18 : vector<8x128xf32>
    %21 = arith.mulf %11, %20 : vector<8x128xf32>
    %22 = arith.select %13, %16, %21 : vector<8x128xi1>, vector<8x128xf32>
    %cst_7 = arith.constant 0.000000e+00 : f32
    %23 = vector.broadcast %cst_7 : f32 to vector<8x128xf32>
    %24 = arith.maximumf %7, %23 : vector<8x128xf32>
    %25 = arith.mulf %7, %0 : vector<8x128xf32>
    %26 = arith.subf %24, %25 : vector<8x128xf32>
    %27 = arith.addf %26, %22 : vector<8x128xf32>
    %cst_8 = arith.constant 0.000000e+00 : f32
    %28 = vector.broadcast %cst_8 : f32 to vector<8x128xf32>
    %29 = arith.select %6, %27, %28 : vector<8x128xi1>, vector<8x128xf32>
    %30 = vector.shape_cast %29 : vector<8x128xf32> to vector<1x8x128xf32>
    %cst_9 = arith.constant dense<0.000000e+00> : vector<1xf32>
    %31 = vector.multi_reduction <add>, %30, %cst_9 [1, 2] : vector<1x8x128xf32> to vector<1xf32>
    %32 = vector.shape_cast %31 : vector<1xf32> to vector<1x1x1xf32>
    %33 = vector.extract %32[0, 0, 0] : f32 from vector<1x1x1xf32>
    %34 = vector.broadcast %33 : f32 to vector<1x8x128xf32>
    %c0_10 = arith.constant 0 : index
    %c0_11 = arith.constant 0 : index
    %c0_12 = arith.constant 0 : index
    %35 = vector.load %arg3[%c0_10, %c0_11, %c0_12] : memref<1x8x128xf32, #tpu.memory_space<vmem>>, vector<1x8x128xf32>
    tpu.vector_store %arg3[%c0_10, %c0_11, %c0_12], %34 {strides = array<i32>} : memref<1x8x128xf32, #tpu.memory_space<vmem>>, vector<1x8x128xf32>,
    return
  }
  func.func @transform_0(%arg0: i32) -> (i32, i32) {
    %c0_i32 = arith.constant 0 : i32
    %c0_i32_0 = arith.constant 0 : i32
    return %arg0, %c0_i32 : i32, i32
  }
  func.func @transform_1(%arg0: i32) -> (i32, i32) {
    %c0_i32 = arith.constant 0 : i32
    %c0_i32_0 = arith.constant 0 : i32
    return %arg0, %c0_i32 : i32, i32
  }
  func.func @transform_2(%arg0: i32) -> (i32, i32, i32) {
    %c0_i32 = arith.constant 0 : i32
    %c0_i32_0 = arith.constant 0 : i32
    %c0_i32_1 = arith.constant 0 : i32
    return %arg0, %c0_i32, %c0_i32_0 : i32, i32, i32
  }
}

</mosaic_0001>

<llo_original>
// kernel: tpu_custom_call.1
$region0: #{tpu_custom_call.1}
  #allocation0 [shape = 'u32[]', space=smem, size = 0x4, offset = 0x4, fixed_abs, tag = 'smem constant byte address 0x4 - core index']
  #allocation1 [shape = 'u32[144,128]{1,0:T(1,128)}', space=vmem, size = 0x12000, scoped, tag = 'internal scratch']
  %s0 = inlined_call_operand.hbm [shape: f32[4,128], index: 0, kind: input, shape index: {}]
  %s1 = inlined_call_operand.hbm [shape: f32[4,128], index: 1, kind: input, shape index: {}]
  %s2 = inlined_call_operand.hbm [shape: f32[1,8,128], index: 2, kind: output, shape index: {}]
  %s3 = sld [smem:[#allocation0]]
  $region26: #{tpu_custom_call.1} parent=0
    _
  %s5 = ssub.s32 1, %s3
  %s6 = scalar_select 0, %s5, %s3
  $region1: #{tpu_custom_call.1} parent=0
    #allocation2 [shape = 'u8[4096]{0}', space=vmem, size = 0x1000, scoped, tag = 'input window, operand 0, single buffered']
    #allocation3 [shape = 's32[1]{0}', space=sflag, size = 0x4, scoped, tag = 'scoped memory for tpu_custom_call.1']
    #allocation4 [shape = 's32[1]{0}', space=sflag, size = 0x4, scoped, tag = 'scoped memory for tpu_custom_call.1']
    #allocation5 [shape = 'u8[4096]{0}', space=vmem, size = 0x1000, scoped, tag = 'input window, operand 1, single buffered']
    #allocation6 [shape = 's32[1]{0}', space=sflag, size = 0x4, scoped, tag = 'scoped memory for tpu_custom_call.1']
    #allocation7 [shape = 'u8[4096]{0}', space=vmem, size = 0x1000, scoped, tag = 'output window, operand 0, single buffered']
    %7 = vsyncpa [#allocation3], 0
    %8 = vsyncpa [#allocation6], 0
    %9 = vsyncpa [#allocation4], 0
    // Predicated region
    $region2: #{tpu_custom_call.1} parent=1 // pred_check
      _
    $region3: #{tpu_custom_call.1} parent=1 // pred_check_branch
      %11 = sbr.rel (0) target = $region5
    $region4: #{tpu_custom_call.1} parent=1 // pred_region
      %s13 = ssub.s32 128, 64
      %14 = vsyncadd [#allocation3], %s13
      %s15 = sshll.u32 [#allocation2], 4
      %s16 = int_to_ptr.vmem [resolvable:$true] %s15
      %21 = dma.hbm_to_vmem [thread:$0]  %s0, 64, %s16, [#allocation3], 64, 64, 4
    $region5: #{tpu_custom_call.1} parent=1 // pred_fallthru
      _
    // Predicated region
    $region6: #{tpu_custom_call.1} parent=1 // pred_check
      _
    $region7: #{tpu_custom_call.1} parent=1 // pred_check_branch
      %23 = sbr.rel (0) target = $region9
    $region8: #{tpu_custom_call.1} parent=1 // pred_region
      %s25 = ssub.s32 128, 64
      %26 = vsyncadd [#allocation6], %s25
      %s27 = sshll.u32 [#allocation5], 4
      %s28 = int_to_ptr.vmem [resolvable:$true] %s27
      %33 = dma.hbm_to_vmem [thread:$0]  %s1, 64, %s28, [#allocation6], 64, 64, 4
    $region9: #{tpu_custom_call.1} parent=1 // pred_fallthru
      _
    // Predicated region
    $region10: #{tpu_custom_call.1} parent=1 // pred_check
      _
    $region11: #{tpu_custom_call.1} parent=1 // pred_check_branch
      %35 = sbr.rel (0) target = $region13
    $region12: #{tpu_custom_call.1} parent=1 // pred_region
      %36 = dma.done [#allocation3], 128
    $region13: #{tpu_custom_call.1} parent=1 // pred_fallthru
      _
    // Predicated region
    $region14: #{tpu_custom_call.1} parent=1 // pred_check
      _
    $region15: #{tpu_custom_call.1} parent=1 // pred_check_branch
      %38 = sbr.rel (0) target = $region17
    $region16: #{tpu_custom_call.1} parent=1 // pred_region
      %39 = dma.done [#allocation6], 128
    $region17: #{tpu_custom_call.1} parent=1 // pred_fallthru
      _
    %v40 = vld [vmem:[#allocation5] sm:$0xff]
    %s41 = smul.u32 0, 8
    %v42 = vlaneseq
    %v43 = vshrl.u32 %v42, 7
    %v44 = vstv %s41
    %v45 = vadd.s32 %v43, %v44
    %vm46 = vcmp.lt.s32.totalorder %v45, 4
    %v47 = vld [vmem:[#allocation2] sm:$0xff]
    %v48 = vand.u32 2147483647, %v47
    %v49 = vsub.f32 0.0, %v48
    %v50 = vmul.f32 %v49, 1.442695
    %v51 = vpow.pop %v50
    %vm52 = vcmp.gt.f32.partialorder %v51, 0.0001
    %v53 = vadd.f32 %v51, 1.0
    %v54 = vlog2.pop %v53
    %v55 = vmul.f32 %v54, 0.6931472
    %v56 = vmul.f32 %v51, 0.5
    %v57 = vsub.f32 1.0, %v56
    %v58 = vmul.f32 %v51, %v57
    %v59 = vsel %vm52, %v55, %v58
    %v60 = vmax.f32 %v47, 0.0
    %v61 = vmul.f32 %v47, %v40
    %v62 = vsub.f32 %v60, %v61
    %v63 = vadd.f32 %v62, %v59
    %v64 = vsel %vm46, %v63, 0.0
    %65 = vadd.xlane.f32.xlu0 %v64
    %v66 = vpop.xlane.xlu0 %65
    %v67 = vrot.slane %v66, 4
    %v68 = vadd.f32 %v66, %v67
    %v69 = vrot.slane %v68, 2
    %v70 = vadd.f32 %v68, %v69
    %v71 = vrot.slane %v70, 1
    %v72 = vadd.f32 %v70, %v71
    %s73 = vtos %v72
    %v74 = vstv %s73
    %75 = vst [vmem:[#allocation7] sm:$0xff] %v74
    // Predicated region
    $region18: #{tpu_custom_call.1} parent=1 // pred_check
      _
    $region19: #{tpu_custom_call.1} parent=1 // pred_check_branch
      %77 = sbr.rel (0) target = $region21
    $region20: #{tpu_custom_call.1} parent=1 // pred_region
      %s79 = ssub.s32 128, 128
      %80 = vsyncadd [#allocation4], %s79
      %s82 = sshll.u32 [#allocation7], 4
      %s83 = int_to_ptr.vmem [resolvable:$true] %s82
      %85 = dma.vmem_to_hbm [thread:$0]  %s83, 128, %s2, [#allocation4]
    $region21: #{tpu_custom_call.1} parent=1 // pred_fallthru
      _
    // Predicated region
    $region22: #{tpu_custom_call.1} parent=1 // pred_check
      _
    $region23: #{tpu_custom_call.1} parent=1 // pred_check_branch
      %87 = sbr.rel (0) target = $region25
    $region24: #{tpu_custom_call.1} parent=1 // pred_region
      %88 = dma.done [#allocation4], 128
    $region25: #{tpu_custom_call.1} parent=1 // pred_fallthru
      _
    %89 = vsyncpa [#allocation3], 1
    %90 = vsyncpa [#allocation6], 1
    %91 = vsyncpa [#allocation4], 1

</llo_original>
